<compile_context>
chip_gen: v7x
topology: tpu7x:2x2x1
jax: 0.10.0
libtpu: 0.0.40
codegen_flags: <defaults>
</compile_context>

<pallas_src>
import jax
import jax.numpy as jnp
from jax.experimental import pallas as pl
from jax.experimental.pallas import tpu as pltpu


def peg_kernel(feat_ref, w_ref, b_ref, o_ref, pad_ref):
    # feat_ref: (bt, H, W, C)        NHWC feature tokens (C on lanes)
    # w_ref:    (k, k, C)            depthwise conv taps (per-channel)
    # b_ref:    (1, C)               conv bias
    # o_ref:    (bt, H, W, C)        depthwise_conv(feat) + bias + feat
    # pad_ref:  (bt, H+2p, W+2p, C)  VMEM scratch: zero-padded spatial plane
    k = w_ref.shape[0]
    p = k // 2
    bt, H, W, C = feat_ref.shape

    feat = feat_ref[...].astype(jnp.float32)

    # Zero-padded plane in VMEM scratch (border stays zero, center = feat).
    pad_ref[...] = jnp.zeros_like(pad_ref)
    pad_ref[:, p:p + H, p:p + W, :] = feat

    w = w_ref[...].astype(jnp.float32)        # (k, k, C)
    bias = b_ref[0].astype(jnp.float32)       # (C,)

    # Residual + bias, then accumulate the k*k shifted taps (cross-correlation,
    # matching nn.Conv2d). Static Python loops -> fully unrolled VPU mul-adds.
    acc = feat + bias
    for i in range(k):
        for j in range(k):
            acc = acc + pad_ref[:, i:i + H, j:j + W, :] * w[i, j]

    o_ref[...] = acc.astype(o_ref.dtype)


def peg(x, conv_w, conv_b, H, W, *, block_b=8):
    """PEG forward. x: (B, N, C) with N = 1 + H*W. Returns (B, N, C)."""
    B, N, C = x.shape
    assert N == H * W + 1, "N must equal 1 + H*W"
    k = conv_w.shape[-1]
    p = k // 2

    # --- wrapper-side layout plumbing (identity math) ---
    cls_tok = x[:, :1, :]                         # (B, 1, C), passes through
    feat = x[:, 1:, :].reshape(B, H, W, C)        # NHWC, channels on lanes
    w_kkc = jnp.transpose(conv_w.reshape(C, k, k), (1, 2, 0))   # (k, k, C)
    b_1c = conv_b.reshape(1, C)

    # Batch blocking: largest divisor of B that is <= block_b (prefer >=8 to
    # amortize per-grid-step overhead; still >=1 for tiny batches).
    bt = next(d for d in (block_b, 8, 4, 2, 1) if d <= B and B % d == 0)

    out_feat = pl.pallas_call(
        peg_kernel,
        out_shape=jax.ShapeDtypeStruct((B, H, W, C), x.dtype),
        grid=(B // bt,),
        in_specs=[
            pl.BlockSpec((bt, H, W, C), lambda b: (b, 0, 0, 0)),
            pl.BlockSpec((k, k, C), lambda b: (0, 0, 0)),
            pl.BlockSpec((1, C), lambda b: (0, 0)),
        ],
        out_specs=pl.BlockSpec((bt, H, W, C), lambda b: (b, 0, 0, 0)),
        scratch_shapes=[
            pltpu.VMEM((bt, H + 2 * p, W + 2 * p, C), jnp.float32),
        ],
        compiler_params=pltpu.CompilerParams(
            dimension_semantics=("parallel",)),
    )(feat, w_kkc, b_1c)

    tokens = out_feat.reshape(B, H * W, C)
    return jnp.concatenate([cls_tok, tokens], axis=1)


def peg_ref(x, conv_w, conv_b, H, W):
    """Pure-JAX reference matching the PyTorch forward."""
    B, N, C = x.shape
    cls_tok = x[:, :1, :]
    feat = jnp.transpose(x[:, 1:, :], (0, 2, 1)).reshape(B, C, H, W)  # NCHW
    y = jax.lax.conv_general_dilated(
        feat, conv_w, window_strides=(1, 1), padding="SAME",
        dimension_numbers=("NCHW", "OIHW", "NCHW"),
        feature_group_count=C)
    y = y + conv_b.reshape(1, C, 1, 1) + feat
    y = jnp.transpose(y.reshape(B, C, H * W), (0, 2, 1))
    return jnp.concatenate([cls_tok, y], axis=1)


if __name__ == "__main__":
    B, H, W, C, K = 2, 4, 4, 128, 3
    N = 1 + H * W

    key = jax.random.PRNGKey(0)
    k_x, k_w, k_b = jax.random.split(key, 3)

    x = jax.random.normal(k_x, (B, N, C), jnp.float32)

    # Depthwise Conv2d(dim, dim, k, groups=dim) parameters, PyTorch shapes.
    fan_in = 1 * K * K
    bound = 1.0 / (fan_in ** 0.5)
    conv_w = jax.random.uniform(k_w, (C, 1, K, K), jnp.float32, -bound, bound)
    conv_b = jax.random.uniform(k_b, (C,), jnp.float32, -bound, bound)

    out = peg(x, conv_w, conv_b, H, W)
    out = jax.block_until_ready(out)

    ref = peg_ref(x, conv_w, conv_b, H, W)
    assert out.shape == (B, N, C), out.shape
    assert jnp.allclose(out, ref, atol=1e-4, rtol=1e-4), (
        float(jnp.max(jnp.abs(out - ref))))

    print("KERNEL_OK")
</pallas_src>

<mosaic_0001>
module attributes {stable_mosaic.version = 11 : i64} {
  func.func @peg_kernel(%arg0: i32, %arg1: memref<2x4x4x128xf32, #tpu.memory_space<vmem>>, %arg2: memref<3x3x128xf32, #tpu.memory_space<vmem>>, %arg3: memref<1x128xf32, #tpu.memory_space<vmem>>, %arg4: memref<2x4x4x128xf32, #tpu.memory_space<vmem>>, %arg5: memref<2x6x6x128xf32, #tpu.memory_space<vmem>>) attributes {dimension_semantics = [#tpu.dimension_semantics<parallel>], iteration_bounds = array<i64: 1>, scalar_prefetch = 0 : i64, scratch_operands = 1 : i64, tpu.core_type = #tpu.core_type<tc>, window_params = [{transform_indices = @transform_0, window_bounds = array<i64: 2, 4, 4, 128>}, {pipeline_mode = #tpu.pipeline_mode<synchronous>, transform_indices = @transform_1, window_bounds = array<i64: 3, 3, 128>}, {pipeline_mode = #tpu.pipeline_mode<synchronous>, transform_indices = @transform_2, window_bounds = array<i64: 1, 128>}, {transform_indices = @transform_3, window_bounds = array<i64: 2, 4, 4, 128>}]} {
    %c0 = arith.constant 0 : index
    %c0_0 = arith.constant 0 : index
    %c0_1 = arith.constant 0 : index
    %c0_2 = arith.constant 0 : index
    %0 = vector.load %arg1[%c0, %c0_0, %c0_1, %c0_2] : memref<2x4x4x128xf32, #tpu.memory_space<vmem>>, vector<2x4x4x128xf32>
    %cst = arith.constant 0.000000e+00 : f32
    %1 = vector.broadcast %cst : f32 to vector<2x6x6x128xf32>
    %c0_3 = arith.constant 0 : index
    %c0_4 = arith.constant 0 : index
    %c0_5 = arith.constant 0 : index
    %c0_6 = arith.constant 0 : index
    %2 = vector.load %arg5[%c0_3, %c0_4, %c0_5, %c0_6] : memref<2x6x6x128xf32, #tpu.memory_space<vmem>>, vector<2x6x6x128xf32>
    tpu.vector_store %arg5[%c0_3, %c0_4, %c0_5, %c0_6], %1 {strides = array<i32>} : memref<2x6x6x128xf32, #tpu.memory_space<vmem>>, vector<2x6x6x128xf32>,
    %c0_7 = arith.constant 0 : index
    %c1 = arith.constant 1 : index
    %c1_8 = arith.constant 1 : index
    %c0_9 = arith.constant 0 : index
    %3 = vector.load %arg5[%c0_7, %c1, %c1_8, %c0_9] : memref<2x6x6x128xf32, #tpu.memory_space<vmem>>, vector<2x4x4x128xf32>
    tpu.vector_store %arg5[%c0_7, %c1, %c1_8, %c0_9], %0 {strides = array<i32>} : memref<2x6x6x128xf32, #tpu.memory_space<vmem>>, vector<2x4x4x128xf32>,
    %c0_10 = arith.constant 0 : index
    %c0_11 = arith.constant 0 : index
    %c0_12 = arith.constant 0 : index
    %4 = vector.load %arg2[%c0_10, %c0_11, %c0_12] : memref<3x3x128xf32, #tpu.memory_space<vmem>>, vector<3x3x128xf32>
    %c0_13 = arith.constant 0 : index
    %c0_14 = arith.constant 0 : index
    %5 = vector.load %arg3[%c0_13, %c0_14] : memref<1x128xf32, #tpu.memory_space<vmem>>, vector<1x128xf32>
    %6 = vector.shape_cast %5 : vector<1x128xf32> to vector<128xf32>
    %7 = vector.shape_cast %6 : vector<128xf32> to vector<1x1x1x128xf32>
    %8 = vector.broadcast %7 : vector<1x1x1x128xf32> to vector<2x4x4x128xf32>
    %9 = arith.addf %0, %8 : vector<2x4x4x128xf32>
    %c0_15 = arith.constant 0 : index
    %c0_16 = arith.constant 0 : index
    %c0_17 = arith.constant 0 : index
    %c0_18 = arith.constant 0 : index
    %10 = vector.load %arg5[%c0_15, %c0_16, %c0_17, %c0_18] : memref<2x6x6x128xf32, #tpu.memory_space<vmem>>, vector<2x4x4x128xf32>
    %11 = vector.extract_strided_slice %4 {offsets = [0, 0, 0], sizes = [1, 1, 128], strides = [1, 1, 1]} : vector<3x3x128xf32> to vector<1x1x128xf32>
    %12 = vector.shape_cast %11 : vector<1x1x128xf32> to vector<128xf32>
    %13 = vector.shape_cast %12 : vector<128xf32> to vector<1x1x1x128xf32>
    %14 = vector.broadcast %13 : vector<1x1x1x128xf32> to vector<2x4x4x128xf32>
    %15 = arith.mulf %10, %14 : vector<2x4x4x128xf32>
    %16 = arith.addf %9, %15 : vector<2x4x4x128xf32>
    %c0_19 = arith.constant 0 : index
    %c0_20 = arith.constant 0 : index
    %c1_21 = arith.constant 1 : index
    %c0_22 = arith.constant 0 : index
    %17 = vector.load %arg5[%c0_19, %c0_20, %c1_21, %c0_22] : memref<2x6x6x128xf32, #tpu.memory_space<vmem>>, vector<2x4x4x128xf32>
    %18 = vector.extract_strided_slice %4 {offsets = [0, 1, 0], sizes = [1, 1, 128], strides = [1, 1, 1]} : vector<3x3x128xf32> to vector<1x1x128xf32>
    %19 = vector.shape_cast %18 : vector<1x1x128xf32> to vector<128xf32>
    %20 = vector.shape_cast %19 : vector<128xf32> to vector<1x1x1x128xf32>
    %21 = vector.broadcast %20 : vector<1x1x1x128xf32> to vector<2x4x4x128xf32>
    %22 = arith.mulf %17, %21 : vector<2x4x4x128xf32>
    %23 = arith.addf %16, %22 : vector<2x4x4x128xf32>
    %c0_23 = arith.constant 0 : index
    %c0_24 = arith.constant 0 : index
    %c2 = arith.constant 2 : index
    %c0_25 = arith.constant 0 : index
    %24 = vector.load %arg5[%c0_23, %c0_24, %c2, %c0_25] : memref<2x6x6x128xf32, #tpu.memory_space<vmem>>, vector<2x4x4x128xf32>
    %25 = vector.extract_strided_slice %4 {offsets = [0, 2, 0], sizes = [1, 1, 128], strides = [1, 1, 1]} : vector<3x3x128xf32> to vector<1x1x128xf32>
    %26 = vector.shape_cast %25 : vector<1x1x128xf32> to vector<128xf32>
    %27 = vector.shape_cast %26 : vector<128xf32> to vector<1x1x1x128xf32>
    %28 = vector.broadcast %27 : vector<1x1x1x128xf32> to vector<2x4x4x128xf32>
    %29 = arith.mulf %24, %28 : vector<2x4x4x128xf32>
    %30 = arith.addf %23, %29 : vector<2x4x4x128xf32>
    %c0_26 = arith.constant 0 : index
    %c1_27 = arith.constant 1 : index
    %c0_28 = arith.constant 0 : index
    %c0_29 = arith.constant 0 : index
    %31 = vector.load %arg5[%c0_26, %c1_27, %c0_28, %c0_29] : memref<2x6x6x128xf32, #tpu.memory_space<vmem>>, vector<2x4x4x128xf32>
    %32 = vector.extract_strided_slice %4 {offsets = [1, 0, 0], sizes = [1, 1, 128], strides = [1, 1, 1]} : vector<3x3x128xf32> to vector<1x1x128xf32>
    %33 = vector.shape_cast %32 : vector<1x1x128xf32> to vector<128xf32>
    %34 = vector.shape_cast %33 : vector<128xf32> to vector<1x1x1x128xf32>
    %35 = vector.broadcast %34 : vector<1x1x1x128xf32> to vector<2x4x4x128xf32>
    %36 = arith.mulf %31, %35 : vector<2x4x4x128xf32>
    %37 = arith.addf %30, %36 : vector<2x4x4x128xf32>
    %c0_30 = arith.constant 0 : index
    %c1_31 = arith.constant 1 : index
    %c1_32 = arith.constant 1 : index
    %c0_33 = arith.constant 0 : index
    %38 = vector.load %arg5[%c0_30, %c1_31, %c1_32, %c0_33] : memref<2x6x6x128xf32, #tpu.memory_space<vmem>>, vector<2x4x4x128xf32>
    %39 = vector.extract_strided_slice %4 {offsets = [1, 1, 0], sizes = [1, 1, 128], strides = [1, 1, 1]} : vector<3x3x128xf32> to vector<1x1x128xf32>
    %40 = vector.shape_cast %39 : vector<1x1x128xf32> to vector<128xf32>
    %41 = vector.shape_cast %40 : vector<128xf32> to vector<1x1x1x128xf32>
    %42 = vector.broadcast %41 : vector<1x1x1x128xf32> to vector<2x4x4x128xf32>
    %43 = arith.mulf %38, %42 : vector<2x4x4x128xf32>
    %44 = arith.addf %37, %43 : vector<2x4x4x128xf32>
    %c0_34 = arith.constant 0 : index
    %c1_35 = arith.constant 1 : index
    %c2_36 = arith.constant 2 : index
    %c0_37 = arith.constant 0 : index
    %45 = vector.load %arg5[%c0_34, %c1_35, %c2_36, %c0_37] : memref<2x6x6x128xf32, #tpu.memory_space<vmem>>, vector<2x4x4x128xf32>
    %46 = vector.extract_strided_slice %4 {offsets = [1, 2, 0], sizes = [1, 1, 128], strides = [1, 1, 1]} : vector<3x3x128xf32> to vector<1x1x128xf32>
    %47 = vector.shape_cast %46 : vector<1x1x128xf32> to vector<128xf32>
    %48 = vector.shape_cast %47 : vector<128xf32> to vector<1x1x1x128xf32>
    %49 = vector.broadcast %48 : vector<1x1x1x128xf32> to vector<2x4x4x128xf32>
    %50 = arith.mulf %45, %49 : vector<2x4x4x128xf32>
    %51 = arith.addf %44, %50 : vector<2x4x4x128xf32>
    %c0_38 = arith.constant 0 : index
    %c2_39 = arith.constant 2 : index
    %c0_40 = arith.constant 0 : index
    %c0_41 = arith.constant 0 : index
    %52 = vector.load %arg5[%c0_38, %c2_39, %c0_40, %c0_41] : memref<2x6x6x128xf32, #tpu.memory_space<vmem>>, vector<2x4x4x128xf32>
    %53 = vector.extract_strided_slice %4 {offsets = [2, 0, 0], sizes = [1, 1, 128], strides = [1, 1, 1]} : vector<3x3x128xf32> to vector<1x1x128xf32>
    %54 = vector.shape_cast %53 : vector<1x1x128xf32> to vector<128xf32>
    %55 = vector.shape_cast %54 : vector<128xf32> to vector<1x1x1x128xf32>
    %56 = vector.broadcast %55 : vector<1x1x1x128xf32> to vector<2x4x4x128xf32>
    %57 = arith.mulf %52, %56 : vector<2x4x4x128xf32>
    %58 = arith.addf %51, %57 : vector<2x4x4x128xf32>
    %c0_42 = arith.constant 0 : index
    %c2_43 = arith.constant 2 : index
    %c1_44 = arith.constant 1 : index
    %c0_45 = arith.constant 0 : index
    %59 = vector.load %arg5[%c0_42, %c2_43, %c1_44, %c0_45] : memref<2x6x6x128xf32, #tpu.memory_space<vmem>>, vector<2x4x4x128xf32>
    %60 = vector.extract_strided_slice %4 {offsets = [2, 1, 0], sizes = [1, 1, 128], strides = [1, 1, 1]} : vector<3x3x128xf32> to vector<1x1x128xf32>
    %61 = vector.shape_cast %60 : vector<1x1x128xf32> to vector<128xf32>
    %62 = vector.shape_cast %61 : vector<128xf32> to vector<1x1x1x128xf32>
    %63 = vector.broadcast %62 : vector<1x1x1x128xf32> to vector<2x4x4x128xf32>
    %64 = arith.mulf %59, %63 : vector<2x4x4x128xf32>
    %65 = arith.addf %58, %64 : vector<2x4x4x128xf32>
    %c0_46 = arith.constant 0 : index
    %c2_47 = arith.constant 2 : index
    %c2_48 = arith.constant 2 : index
    %c0_49 = arith.constant 0 : index
    %66 = vector.load %arg5[%c0_46, %c2_47, %c2_48, %c0_49] : memref<2x6x6x128xf32, #tpu.memory_space<vmem>>, vector<2x4x4x128xf32>
    %67 = vector.extract_strided_slice %4 {offsets = [2, 2, 0], sizes = [1, 1, 128], strides = [1, 1, 1]} : vector<3x3x128xf32> to vector<1x1x128xf32>
    %68 = vector.shape_cast %67 : vector<1x1x128xf32> to vector<128xf32>
    %69 = vector.shape_cast %68 : vector<128xf32> to vector<1x1x1x128xf32>
    %70 = vector.broadcast %69 : vector<1x1x1x128xf32> to vector<2x4x4x128xf32>
    %71 = arith.mulf %66, %70 : vector<2x4x4x128xf32>
    %72 = arith.addf %65, %71 : vector<2x4x4x128xf32>
    %c0_50 = arith.constant 0 : index
    %c0_51 = arith.constant 0 : index
    %c0_52 = arith.constant 0 : index
    %c0_53 = arith.constant 0 : index
    %73 = vector.load %arg4[%c0_50, %c0_51, %c0_52, %c0_53] : memref<2x4x4x128xf32, #tpu.memory_space<vmem>>, vector<2x4x4x128xf32>
    tpu.vector_store %arg4[%c0_50, %c0_51, %c0_52, %c0_53], %72 {strides = array<i32>} : memref<2x4x4x128xf32, #tpu.memory_space<vmem>>, vector<2x4x4x128xf32>,
    return
  }
  func.func @transform_0(%arg0: i32) -> (i32, i32, i32, i32) {
    %c0_i32 = arith.constant 0 : i32
    %c0_i32_0 = arith.constant 0 : i32
    %c0_i32_1 = arith.constant 0 : i32
    %c0_i32_2 = arith.constant 0 : i32
    return %arg0, %c0_i32, %c0_i32_0, %c0_i32_1 : i32, i32, i32, i32
  }
  func.func @transform_1(%arg0: i32) -> (i32, i32, i32) {
    %c0_i32 = arith.constant 0 : i32
    %c0_i32_0 = arith.constant 0 : i32
    %c0_i32_1 = arith.constant 0 : i32
    %c0_i32_2 = arith.constant 0 : i32
    return %c0_i32, %c0_i32_0, %c0_i32_1 : i32, i32, i32
  }
  func.func @transform_2(%arg0: i32) -> (i32, i32) {
    %c0_i32 = arith.constant 0 : i32
    %c0_i32_0 = arith.constant 0 : i32
    %c0_i32_1 = arith.constant 0 : i32
    return %c0_i32, %c0_i32_0 : i32, i32
  }
  func.func @transform_3(%arg0: i32) -> (i32, i32, i32, i32) {
    %c0_i32 = arith.constant 0 : i32
    %c0_i32_0 = arith.constant 0 : i32
    %c0_i32_1 = arith.constant 0 : i32
    %c0_i32_2 = arith.constant 0 : i32
    return %arg0, %c0_i32, %c0_i32_0, %c0_i32_1 : i32, i32, i32, i32
  }
}

</mosaic_0001>

<llo_original>
// kernel: tpu_custom_call.1
$region0: #{tpu_custom_call.1}
  #allocation0 [shape = 'u32[]', space=smem, size = 0x4, offset = 0x4, fixed_abs, tag = 'smem constant byte address 0x4 - core index']
  #allocation1 [shape = 'u32[144,128]{1,0:T(1,128)}', space=vmem, size = 0x12000, scoped, tag = 'internal scratch']
  #allocation2 [shape = 'f32[2,6,6,128]{3,2,1,0:T(8,128)}', space=vmem, size = 0xc000, scoped, tag = 'scratch operand']
  %s0 = inlined_call_operand.hbm [shape: f32[2,4,4,128], index: 0, kind: input, shape index: {}]
  %s1 = inlined_call_operand.hbm [shape: f32[3,3,128], index: 1, kind: input, shape index: {}]
  %s2 = inlined_call_operand.vmem [shape: f32[1,128], index: 2, kind: input, shape index: {}]
  %s3 = inlined_call_operand.hbm [shape: f32[2,4,4,128], index: 3, kind: output, shape index: {}]
  %s4 = sld [smem:[#allocation0]]
  $region30: #{tpu_custom_call.1} parent=0
    _
  %s6 = ssub.s32 1, %s4
  %s7 = scalar_select 0, %s6, %s4
  $region1: #{tpu_custom_call.1} parent=0
    #allocation3 [shape = 'u8[16384]{0}', space=vmem, size = 0x4000, scoped, tag = 'input window, operand 0, single buffered']
    #allocation4 [shape = 's32[1]{0}', space=sflag, size = 0x4, scoped, tag = 'scoped memory for tpu_custom_call.1']
    #allocation5 [shape = 's32[1]{0}', space=sflag, size = 0x4, scoped, tag = 'scoped memory for tpu_custom_call.1']
    #allocation6 [shape = 'u8[6144]{0}', space=vmem, size = 0x1800, scoped, tag = 'input window, operand 1, single buffered']
    #allocation7 [shape = 's32[1]{0}', space=sflag, size = 0x4, scoped, tag = 'scoped memory for tpu_custom_call.1']
    #allocation8 [shape = 'u8[16384]{0}', space=vmem, size = 0x4000, scoped, tag = 'output window, operand 0, single buffered']
    %8 = vsyncpa [#allocation4], 0
    %9 = vsyncpa [#allocation7], 0
    %10 = vsyncpa [#allocation5], 0
    // Predicated region
    $region2: #{tpu_custom_call.1} parent=1 // pred_check
      _
    $region3: #{tpu_custom_call.1} parent=1 // pred_check_branch
      %12 = sbr.rel (0) target = $region5
    $region4: #{tpu_custom_call.1} parent=1 // pred_region
      %s14 = ssub.s32 512, 512
      %15 = vsyncadd [#allocation4], %s14
      %s16 = sshll.u32 [#allocation3], 4
      %s17 = int_to_ptr.vmem [resolvable:$true] %s16
      %22 = dma.hbm_to_vmem [thread:$0]  %s0, 512, %s17, [#allocation4], 64, 64, 4
    $region5: #{tpu_custom_call.1} parent=1 // pred_fallthru
      _
    // Predicated region
    $region6: #{tpu_custom_call.1} parent=1 // pred_check
      _
    $region7: #{tpu_custom_call.1} parent=1 // pred_check_branch
      %24 = sbr.rel (0) target = $region9
    $region8: #{tpu_custom_call.1} parent=1 // pred_region
      %s26 = ssub.s32 192, 192
      %27 = vsyncadd [#allocation7], %s26
      %s28 = sshll.u32 [#allocation6], 4
      %s29 = int_to_ptr.vmem [resolvable:$true] %s28
      %34 = dma.hbm_to_vmem [thread:$0]  %s1, 192, %s29, [#allocation7], 64, 64, 4
    $region9: #{tpu_custom_call.1} parent=1 // pred_fallthru
      _
    // Predicated region
    $region10: #{tpu_custom_call.1} parent=1 // pred_check
      _
    $region11: #{tpu_custom_call.1} parent=1 // pred_check_branch
      %36 = sbr.rel (0) target = $region13
    $region12: #{tpu_custom_call.1} parent=1 // pred_region
      _
    $region13: #{tpu_custom_call.1} parent=1 // pred_fallthru
      _
    // Predicated region
    $region14: #{tpu_custom_call.1} parent=1 // pred_check
      _
    $region15: #{tpu_custom_call.1} parent=1 // pred_check_branch
      %38 = sbr.rel (0) target = $region17
    $region16: #{tpu_custom_call.1} parent=1 // pred_region
      %39 = dma.done [#allocation4], 512
    $region17: #{tpu_custom_call.1} parent=1 // pred_fallthru
      _
    // Predicated region
    $region18: #{tpu_custom_call.1} parent=1 // pred_check
      _
    $region19: #{tpu_custom_call.1} parent=1 // pred_check_branch
      %41 = sbr.rel (0) target = $region21
    $region20: #{tpu_custom_call.1} parent=1 // pred_region
      %42 = dma.done [#allocation7], 192
    $region21: #{tpu_custom_call.1} parent=1 // pred_fallthru
      _
    %v43 = vld [vmem:[#allocation3] sm:$0xf]
    %v44 = vld [vmem:[#allocation3 + $0x4] sm:$0xf]
    %v45 = vld [vmem:[#allocation3 + $0x8] sm:$0xf]
    %v46 = vld [vmem:[#allocation3 + $0xc] sm:$0xf]
    %v47 = vld [vmem:[#allocation3 + $0x10] sm:$0xf]
    %v48 = vld [vmem:[#allocation3 + $0x14] sm:$0xf]
    %v49 = vld [vmem:[#allocation3 + $0x18] sm:$0xf]
    %v50 = vld [vmem:[#allocation3 + $0x1c] sm:$0xf]
    %51 = vst [vmem:[#allocation2] sm:$0x3f] 0.0
    %52 = vst [vmem:[#allocation2 + $0x8] sm:$0x3f] 0.0
    %53 = vst [vmem:[#allocation2 + $0x10] sm:$0x3f] 0.0
    %54 = vst [vmem:[#allocation2 + $0x18] sm:$0x3f] 0.0
    %55 = vst [vmem:[#allocation2 + $0x20] sm:$0x3f] 0.0
    %56 = vst [vmem:[#allocation2 + $0x28] sm:$0x3f] 0.0
    %57 = vst [vmem:[#allocation2 + $0x30] sm:$0x3f] 0.0
    %58 = vst [vmem:[#allocation2 + $0x38] sm:$0x3f] 0.0
    %59 = vst [vmem:[#allocation2 + $0x40] sm:$0x3f] 0.0
    %60 = vst [vmem:[#allocation2 + $0x48] sm:$0x3f] 0.0
    %61 = vst [vmem:[#allocation2 + $0x50] sm:$0x3f] 0.0
    %62 = vst [vmem:[#allocation2 + $0x58] sm:$0x3f] 0.0
    %s63 = scalar_lea.vmem [#allocation2], 8
    %64 = vst [vmem:[%s63 + $0x1] sm:$0xf] %v43
    %65 = vst [vmem:[%s63 + $0x9] sm:$0xf] %v44
    %66 = vst [vmem:[%s63 + $0x11] sm:$0xf] %v45
    %67 = vst [vmem:[%s63 + $0x19] sm:$0xf] %v46
    %68 = vst [vmem:[%s63 + $0x31] sm:$0xf] %v47
    %69 = vst [vmem:[%s63 + $0x39] sm:$0xf] %v48
    %70 = vst [vmem:[%s63 + $0x41] sm:$0xf] %v49
    %71 = vst [vmem:[%s63 + $0x49] sm:$0xf] %v50
    %v72 = vld [vmem:[#allocation6] sm:$0x7]
    %v73 = vld [vmem:[#allocation6 + $0x4] sm:$0x7]
    %v74 = vld [vmem:[#allocation6 + $0x8] sm:$0x7]
    %v75 = vld [vmem:[%s2] sm:$0x1]
    %v77 = vlaneseq
    %v78 = vshrl.u32 %v77, 7
    %v79 = vsub.s32 0, %v78
    %v80 = vrot.slane %v75, %v79
    %v82 = vadd.f32 %v43, %v80
    %v83 = vadd.f32 %v44, %v80
    %v84 = vadd.f32 %v45, %v80
    %v85 = vadd.f32 %v46, %v80
    %v86 = vadd.f32 %v47, %v80
    %v87 = vadd.f32 %v48, %v80
    %v88 = vadd.f32 %v49, %v80
    %v89 = vadd.f32 %v50, %v80
    %v90 = vld [vmem:[#allocation2] sm:$0xf]
    %v91 = vld [vmem:[#allocation2 + $0x8] sm:$0xf]
    %v92 = vld [vmem:[#allocation2 + $0x10] sm:$0xf]
    %v93 = vld [vmem:[#allocation2 + $0x18] sm:$0xf]
    %v94 = vld [vmem:[#allocation2 + $0x30] sm:$0xf]
    %v95 = vld [vmem:[#allocation2 + $0x38] sm:$0xf]
    %v96 = vld [vmem:[#allocation2 + $0x40] sm:$0xf]
    %v97 = vld [vmem:[#allocation2 + $0x48] sm:$0xf]
    %v98 = vlaneseq
    %v99 = vshrl.u32 %v98, 7
    %v100 = vsub.s32 0, %v99
    %v101 = vrot.slane %v72, %v100
    %v102 = vmul.f32 %v90, %v101
    %v103 = vmul.f32 %v91, %v101
    %v104 = vmul.f32 %v92, %v101
    %v105 = vmul.f32 %v93, %v101
    %v106 = vmul.f32 %v94, %v101
    %v107 = vmul.f32 %v95, %v101
    %v108 = vmul.f32 %v96, %v101
    %v109 = vmul.f32 %v97, %v101
    %v110 = vadd.f32 %v82, %v102
    %v111 = vadd.f32 %v83, %v103
    %v112 = vadd.f32 %v84, %v104
    %v113 = vadd.f32 %v85, %v105
    %v114 = vadd.f32 %v86, %v106
    %v115 = vadd.f32 %v87, %v107
    %v116 = vadd.f32 %v88, %v108
    %v117 = vadd.f32 %v89, %v109
    %v118 = vld [vmem:[#allocation2 + $0x1] sm:$0xf]
    %v119 = vld [vmem:[#allocation2 + $0x9] sm:$0xf]
    %v120 = vld [vmem:[#allocation2 + $0x11] sm:$0xf]
    %v121 = vld [vmem:[#allocation2 + $0x19] sm:$0xf]
    %v122 = vld [vmem:[#allocation2 + $0x31] sm:$0xf]
    %v123 = vld [vmem:[#allocation2 + $0x39] sm:$0xf]
    %v124 = vld [vmem:[#allocation2 + $0x41] sm:$0xf]
    %v125 = vld [vmem:[#allocation2 + $0x49] sm:$0xf]
    %v126 = vlaneseq
    %v127 = vshrl.u32 %v126, 7
    %v128 = vsub.s32 1, %v127
    %v129 = vrot.slane %v72, %v128
    %v130 = vmul.f32 %v118, %v129
    %v131 = vmul.f32 %v119, %v129
    %v132 = vmul.f32 %v120, %v129
    %v133 = vmul.f32 %v121, %v129
    %v134 = vmul.f32 %v122, %v129
    %v135 = vmul.f32 %v123, %v129
    %v136 = vmul.f32 %v124, %v129
    %v137 = vmul.f32 %v125, %v129
    %v138 = vadd.f32 %v110, %v130
    %v139 = vadd.f32 %v111, %v131
    %v140 = vadd.f32 %v112, %v132
    %v141 = vadd.f32 %v113, %v133
    %v142 = vadd.f32 %v114, %v134
    %v143 = vadd.f32 %v115, %v135
    %v144 = vadd.f32 %v116, %v136
    %v145 = vadd.f32 %v117, %v137
    %v146 = vld [vmem:[#allocation2 + $0x2] sm:$0xf]
    %v147 = vld [vmem:[#allocation2 + $0xa] sm:$0xf]
    %v148 = vld [vmem:[#allocation2 + $0x12] sm:$0xf]
    %v149 = vld [vmem:[#allocation2 + $0x1a] sm:$0xf]
    %v150 = vld [vmem:[#allocation2 + $0x32] sm:$0xf]
    %v151 = vld [vmem:[#allocation2 + $0x3a] sm:$0xf]
    %v152 = vld [vmem:[#allocation2 + $0x42] sm:$0xf]
    %v153 = vld [vmem:[#allocation2 + $0x4a] sm:$0xf]
    %v154 = vlaneseq
    %v155 = vshrl.u32 %v154, 7
    %v156 = vsub.s32 2, %v155
    %v157 = vrot.slane %v72, %v156
    %v158 = vmul.f32 %v146, %v157
    %v159 = vmul.f32 %v147, %v157
    %v160 = vmul.f32 %v148, %v157
    %v161 = vmul.f32 %v149, %v157
    %v162 = vmul.f32 %v150, %v157
    %v163 = vmul.f32 %v151, %v157
    %v164 = vmul.f32 %v152, %v157
    %v165 = vmul.f32 %v153, %v157
    %v166 = vadd.f32 %v138, %v158
    %v167 = vadd.f32 %v139, %v159
    %v168 = vadd.f32 %v140, %v160
    %v169 = vadd.f32 %v141, %v161
    %v170 = vadd.f32 %v142, %v162
    %v171 = vadd.f32 %v143, %v163
    %v172 = vadd.f32 %v144, %v164
    %v173 = vadd.f32 %v145, %v165
    %v174 = vld [vmem:[%s63] sm:$0xf]
    %v175 = vld [vmem:[%s63 + $0x8] sm:$0xf]
    %v176 = vld [vmem:[%s63 + $0x10] sm:$0xf]
    %v177 = vld [vmem:[%s63 + $0x18] sm:$0xf]
    %v178 = vld [vmem:[%s63 + $0x30] sm:$0xf]
    %v179 = vld [vmem:[%s63 + $0x38] sm:$0xf]
    %v180 = vld [vmem:[%s63 + $0x40] sm:$0xf]
    %v181 = vld [vmem:[%s63 + $0x48] sm:$0xf]
    %v182 = vlaneseq
    %v183 = vshrl.u32 %v182, 7
    %v184 = vsub.s32 0, %v183
    %v185 = vrot.slane %v73, %v184
    %v186 = vmul.f32 %v174, %v185
    %v187 = vmul.f32 %v175, %v185
    %v188 = vmul.f32 %v176, %v185
    %v189 = vmul.f32 %v177, %v185
    %v190 = vmul.f32 %v178, %v185
    %v191 = vmul.f32 %v179, %v185
    %v192 = vmul.f32 %v180, %v185
    %v193 = vmul.f32 %v181, %v185
    %v194 = vadd.f32 %v166, %v186
    %v195 = vadd.f32 %v167, %v187
    %v196 = vadd.f32 %v168, %v188
    %v197 = vadd.f32 %v169, %v189
    %v198 = vadd.f32 %v170, %v190
    %v199 = vadd.f32 %v171, %v191
    %v200 = vadd.f32 %v172, %v192
    %v201 = vadd.f32 %v173, %v193
    %v202 = vld [vmem:[%s63 + $0x1] sm:$0xf]
    %v203 = vld [vmem:[%s63 + $0x9] sm:$0xf]
    %v204 = vld [vmem:[%s63 + $0x11] sm:$0xf]
    %v205 = vld [vmem:[%s63 + $0x19] sm:$0xf]
    %v206 = vld [vmem:[%s63 + $0x31] sm:$0xf]
    %v207 = vld [vmem:[%s63 + $0x39] sm:$0xf]
    %v208 = vld [vmem:[%s63 + $0x41] sm:$0xf]
    %v209 = vld [vmem:[%s63 + $0x49] sm:$0xf]
    %v210 = vlaneseq
    %v211 = vshrl.u32 %v210, 7
    %v212 = vsub.s32 1, %v211
    %v213 = vrot.slane %v73, %v212
    %v214 = vmul.f32 %v202, %v213
    %v215 = vmul.f32 %v203, %v213
    %v216 = vmul.f32 %v204, %v213
    %v217 = vmul.f32 %v205, %v213
    %v218 = vmul.f32 %v206, %v213
    %v219 = vmul.f32 %v207, %v213
    %v220 = vmul.f32 %v208, %v213
    %v221 = vmul.f32 %v209, %v213
    %v222 = vadd.f32 %v194, %v214
    %v223 = vadd.f32 %v195, %v215
    %v224 = vadd.f32 %v196, %v216
    %v225 = vadd.f32 %v197, %v217
    %v226 = vadd.f32 %v198, %v218
    %v227 = vadd.f32 %v199, %v219
    %v228 = vadd.f32 %v200, %v220
    %v229 = vadd.f32 %v201, %v221
    %v230 = vld [vmem:[%s63 + $0x2] sm:$0xf]
    %v231 = vld [vmem:[%s63 + $0xa] sm:$0xf]
    %v232 = vld [vmem:[%s63 + $0x12] sm:$0xf]
    %v233 = vld [vmem:[%s63 + $0x1a] sm:$0xf]
    %v234 = vld [vmem:[%s63 + $0x32] sm:$0xf]
    %v235 = vld [vmem:[%s63 + $0x3a] sm:$0xf]
    %v236 = vld [vmem:[%s63 + $0x42] sm:$0xf]
    %v237 = vld [vmem:[%s63 + $0x4a] sm:$0xf]
    %v238 = vlaneseq
    %v239 = vshrl.u32 %v238, 7
    %v240 = vsub.s32 2, %v239
    %v241 = vrot.slane %v73, %v240
    %v242 = vmul.f32 %v230, %v241
    %v243 = vmul.f32 %v231, %v241
    %v244 = vmul.f32 %v232, %v241
    %v245 = vmul.f32 %v233, %v241
    %v246 = vmul.f32 %v234, %v241
    %v247 = vmul.f32 %v235, %v241
    %v248 = vmul.f32 %v236, %v241
    %v249 = vmul.f32 %v237, %v241
    %v250 = vadd.f32 %v222, %v242
    %v251 = vadd.f32 %v223, %v243
    %v252 = vadd.f32 %v224, %v244
    %v253 = vadd.f32 %v225, %v245
    %v254 = vadd.f32 %v226, %v246
    %v255 = vadd.f32 %v227, %v247
    %v256 = vadd.f32 %v228, %v248
    %v257 = vadd.f32 %v229, %v249
    %s258 = scalar_lea.vmem [#allocation2], 16
    %v259 = vld [vmem:[%s258] sm:$0xf]
    %v260 = vld [vmem:[%s258 + $0x8] sm:$0xf]
    %v261 = vld [vmem:[%s258 + $0x10] sm:$0xf]
    %v262 = vld [vmem:[%s258 + $0x18] sm:$0xf]
    %v263 = vld [vmem:[%s258 + $0x30] sm:$0xf]
    %v264 = vld [vmem:[%s258 + $0x38] sm:$0xf]
    %v265 = vld [vmem:[%s258 + $0x40] sm:$0xf]
    %v266 = vld [vmem:[%s258 + $0x48] sm:$0xf]
    %v267 = vlaneseq
    %v268 = vshrl.u32 %v267, 7
    %v269 = vsub.s32 0, %v268
    %v270 = vrot.slane %v74, %v269
    %v271 = vmul.f32 %v259, %v270
    %v272 = vmul.f32 %v260, %v270
    %v273 = vmul.f32 %v261, %v270
    %v274 = vmul.f32 %v262, %v270
    %v275 = vmul.f32 %v263, %v270
    %v276 = vmul.f32 %v264, %v270
    %v277 = vmul.f32 %v265, %v270
    %v278 = vmul.f32 %v266, %v270
    %v279 = vadd.f32 %v250, %v271
    %v280 = vadd.f32 %v251, %v272
    %v281 = vadd.f32 %v252, %v273
    %v282 = vadd.f32 %v253, %v274
    %v283 = vadd.f32 %v254, %v275
    %v284 = vadd.f32 %v255, %v276
    %v285 = vadd.f32 %v256, %v277
    %v286 = vadd.f32 %v257, %v278
    %v287 = vld [vmem:[%s258 + $0x1] sm:$0xf]
    %v288 = vld [vmem:[%s258 + $0x9] sm:$0xf]
    %v289 = vld [vmem:[%s258 + $0x11] sm:$0xf]
    %v290 = vld [vmem:[%s258 + $0x19] sm:$0xf]
    %v291 = vld [vmem:[%s258 + $0x31] sm:$0xf]
    %v292 = vld [vmem:[%s258 + $0x39] sm:$0xf]
    %v293 = vld [vmem:[%s258 + $0x41] sm:$0xf]
    %v294 = vld [vmem:[%s258 + $0x49] sm:$0xf]
    %v295 = vlaneseq
    %v296 = vshrl.u32 %v295, 7
    %v297 = vsub.s32 1, %v296
    %v298 = vrot.slane %v74, %v297
    %v299 = vmul.f32 %v287, %v298
    %v300 = vmul.f32 %v288, %v298
    %v301 = vmul.f32 %v289, %v298
    %v302 = vmul.f32 %v290, %v298
    %v303 = vmul.f32 %v291, %v298
    %v304 = vmul.f32 %v292, %v298
    %v305 = vmul.f32 %v293, %v298
    %v306 = vmul.f32 %v294, %v298
    %v307 = vadd.f32 %v279, %v299
    %v308 = vadd.f32 %v280, %v300
    %v309 = vadd.f32 %v281, %v301
    %v310 = vadd.f32 %v282, %v302
    %v311 = vadd.f32 %v283, %v303
    %v312 = vadd.f32 %v284, %v304
    %v313 = vadd.f32 %v285, %v305
    %v314 = vadd.f32 %v286, %v306
    %v315 = vld [vmem:[%s258 + $0x2] sm:$0xf]
    %v316 = vld [vmem:[%s258 + $0xa] sm:$0xf]
    %v317 = vld [vmem:[%s258 + $0x12] sm:$0xf]
    %v318 = vld [vmem:[%s258 + $0x1a] sm:$0xf]
    %v319 = vld [vmem:[%s258 + $0x32] sm:$0xf]
    %v320 = vld [vmem:[%s258 + $0x3a] sm:$0xf]
    %v321 = vld [vmem:[%s258 + $0x42] sm:$0xf]
    %v322 = vld [vmem:[%s258 + $0x4a] sm:$0xf]
    %v323 = vlaneseq
    %v324 = vshrl.u32 %v323, 7
    %v325 = vsub.s32 2, %v324
    %v326 = vrot.slane %v74, %v325
    %v327 = vmul.f32 %v315, %v326
    %v328 = vmul.f32 %v316, %v326
    %v329 = vmul.f32 %v317, %v326
    %v330 = vmul.f32 %v318, %v326
    %v331 = vmul.f32 %v319, %v326
    %v332 = vmul.f32 %v320, %v326
    %v333 = vmul.f32 %v321, %v326
    %v334 = vmul.f32 %v322, %v326
    %v335 = vadd.f32 %v307, %v327
    %v336 = vadd.f32 %v308, %v328
    %v337 = vadd.f32 %v309, %v329
    %v338 = vadd.f32 %v310, %v330
    %v339 = vadd.f32 %v311, %v331
    %v340 = vadd.f32 %v312, %v332
    %v341 = vadd.f32 %v313, %v333
    %v342 = vadd.f32 %v314, %v334
    %343 = vst [vmem:[#allocation8] sm:$0xf] %v335
    %344 = vst [vmem:[#allocation8 + $0x4] sm:$0xf] %v336
    %345 = vst [vmem:[#allocation8 + $0x8] sm:$0xf] %v337
    %346 = vst [vmem:[#allocation8 + $0xc] sm:$0xf] %v338
    %347 = vst [vmem:[#allocation8 + $0x10] sm:$0xf] %v339
    %348 = vst [vmem:[#allocation8 + $0x14] sm:$0xf] %v340
    %349 = vst [vmem:[#allocation8 + $0x18] sm:$0xf] %v341
    %350 = vst [vmem:[#allocation8 + $0x1c] sm:$0xf] %v342
    // Predicated region
    $region22: #{tpu_custom_call.1} parent=1 // pred_check
      _
    $region23: #{tpu_custom_call.1} parent=1 // pred_check_branch
      %352 = sbr.rel (0) target = $region25
    $region24: #{tpu_custom_call.1} parent=1 // pred_region
      %s354 = ssub.s32 512, 512
      %355 = vsyncadd [#allocation5], %s354
      %s356 = sshll.u32 [#allocation8], 4
      %s357 = int_to_ptr.vmem [resolvable:$true] %s356
      %362 = dma.vmem_to_hbm [thread:$0]  %s357, 512, %s3, [#allocation5], 64, 64, 4
    $region25: #{tpu_custom_call.1} parent=1 // pred_fallthru
      _
    // Predicated region
    $region26: #{tpu_custom_call.1} parent=1 // pred_check
      _
    $region27: #{tpu_custom_call.1} parent=1 // pred_check_branch
      %364 = sbr.rel (0) target = $region29
    $region28: #{tpu_custom_call.1} parent=1 // pred_region
      %365 = dma.done [#allocation5], 512
    $region29: #{tpu_custom_call.1} parent=1 // pred_fallthru
      _
    %366 = vsyncpa [#allocation4], 1
    %367 = vsyncpa [#allocation7], 1
    %368 = vsyncpa [#allocation5], 1

</llo_original>
